<compile_context>
chip_gen: v7x
topology: tpu7x:2x2x1
jax: 0.10.0
libtpu: 0.0.40
codegen_flags: <defaults>
</compile_context>

<pallas_src>
import functools

import jax
import jax.numpy as jnp
from jax.experimental import pallas as pl
from jax.experimental.pallas import tpu as pltpu

LANE = 128                 # vreg lane width; output last dim stays lane-dense
_MAX_BLOCK_ROWS = 2048     # (2048, 128) f32 = 1 MiB / tile -> 4 MiB double-buffered


def _round_up(a, b):
    return (a + b - 1) // b * b


def _lshr32(x, k):
    """Logical right shift of int32 (arithmetic shift + mask)."""
    return (x >> k) & jnp.int32((1 << (32 - k)) - 1)


def _fmix32(x):
    """murmur3 32-bit finalizer; int32 arithmetic wraps (two's complement)."""
    x = x ^ _lshr32(x, 16)
    x = x * jnp.int32(-2048144789)    # 0x85ebca6b
    x = x ^ _lshr32(x, 13)
    x = x * jnp.int32(-1028477387)    # 0xc2b2ae35
    x = x ^ _lshr32(x, 16)
    return x


def _dropout_kernel(seed_ref, x_ref, o_ref, *, p, thr, block_rows):
    """One (block_rows, LANE) tile of inverted-scaled dropout."""
    shape = x_ref.shape
    row0 = pl.program_id(0) * block_rows            # global row offset of this tile

    # Global flat element index (tiling-invariant randomness).
    r = jax.lax.broadcasted_iota(jnp.int32, shape, 0)
    c = jax.lax.broadcasted_iota(jnp.int32, shape, 1)
    idx = (row0 + r) * jnp.int32(shape[1]) + c

    # Mix the runtime seed in (scalar-slot work only), then hash per element.
    mixed = seed_ref[0] * jnp.int32(-1640531527) + jnp.int32(843314857)
    h = _fmix32(idx ^ mixed)

    # h is uniform over all 32-bit patterns; signed compare against
    # thr = round(p * 2^32) - 2^31 gives P(keep) = 1 - p at full resolution.
    keep = h >= jnp.int32(thr)

    scale = jnp.asarray(1.0 / (1.0 - p), dtype=x_ref.dtype)
    o_ref[...] = jnp.where(keep, x_ref[...] * scale, 0).astype(o_ref.dtype)


def custom_dropout(x, p=0.5, seed=0, training=True):
    """Pallas equivalent of CustomDropout.forward (the server-side dropout)."""
    if (not training) or p <= 0.0:
        return x
    assert 0.0 < p < 1.0

    orig_shape = x.shape
    n = x.size
    itemsize = jnp.dtype(x.dtype).itemsize
    sub = {4: 8, 2: 16, 1: 32}.get(itemsize, 8)     # native sublane multiple

    # Lane-dense 2-D view.  For the usual conv-activation sizes n % 128 == 0,
    # so this is a free reshape (no pad, no trailing slice copy).
    if n % LANE == 0:
        rows = n // LANE
        x2d = x.reshape(rows, LANE)
        padded = False
    else:
        pad = (-n) % LANE
        x2d = jnp.pad(x.reshape(-1), (0, pad)).reshape(-1, LANE)
        rows = x2d.shape[0]
        padded = True

    # Big tile (~1 MiB f32); last (partial) block is masked by Pallas.
    block_rows = min(_MAX_BLOCK_ROWS, _round_up(rows, sub))
    grid = pl.cdiv(rows, block_rows)

    thr = int(round(p * (1 << 32))) - (1 << 31)
    thr = max(-(1 << 31), min((1 << 31) - 1, thr))

    seed_arr = jnp.asarray([seed], dtype=jnp.int32)
    kernel = functools.partial(_dropout_kernel, p=float(p), thr=thr,
                               block_rows=block_rows)

    out2d = pl.pallas_call(
        kernel,
        out_shape=jax.ShapeDtypeStruct((rows, LANE), x.dtype),
        grid_spec=pltpu.PrefetchScalarGridSpec(
            num_scalar_prefetch=1,
            grid=(grid,),
            in_specs=[pl.BlockSpec((block_rows, LANE),
                                   lambda i, seed_ref: (i, 0))],
            out_specs=pl.BlockSpec((block_rows, LANE),
                                   lambda i, seed_ref: (i, 0)),
        ),
        compiler_params=pltpu.CompilerParams(
            dimension_semantics=("parallel",)),     # lets v7x use both TCs
        cost_estimate=pl.CostEstimate(
            flops=12 * rows * LANE,
            transcendentals=0,
            bytes_accessed=2 * rows * LANE * itemsize),
    )(seed_arr, x2d)

    if padded:
        return out2d.reshape(-1)[:n].reshape(orig_shape)
    return out2d.reshape(orig_shape)


# TODO(synk): the mmap-file IPC / server handshake (write_data_to_mmap,
# signal_server_ready_dropout, wait_for_server_response, read_tensor_from_mmap)
# has no Pallas equivalent; only the dropout math the server performs is
# implemented here.


if __name__ == "__main__":
    key = jax.random.PRNGKey(0)
    # NCHW, as in the VGG19 client: batch=2, channels=4, spatial=16x16
    x = jax.random.normal(key, (2, 4, 16, 16), dtype=jnp.float32)

    p = 0.5
    y = custom_dropout(x, p=p, seed=0, training=True)
    y = jax.block_until_ready(y)

    # Basic sanity checks on dropout semantics.
    assert y.shape == x.shape and y.dtype == x.dtype
    kept = y != 0.0
    # surviving elements must equal x / (1 - p)
    max_err = jnp.max(jnp.abs(jnp.where(kept, y - x / (1.0 - p), 0.0)))
    assert float(max_err) < 1e-5, float(max_err)
    keep_frac = float(jnp.mean(kept.astype(jnp.float32)))
    assert 0.3 < keep_frac < 0.7, keep_frac  # ~1-p = 0.5 over 2048 elements

    # eval mode / p=0 must be identity
    y_eval = custom_dropout(x, p=p, seed=0, training=False)
    assert float(jnp.max(jnp.abs(y_eval - x))) == 0.0

    print("KERNEL_OK")
</pallas_src>

<mosaic_0001>
module attributes {stable_mosaic.version = 11 : i64} {
  func.func @_dropout_kernel(%arg0: i32, %arg1: memref<1xi32, #tpu.memory_space<smem>>, %arg2: memref<16x128xf32, #tpu.memory_space<vmem>>, %arg3: memref<16x128xf32, #tpu.memory_space<vmem>>) attributes {dimension_semantics = [#tpu.dimension_semantics<parallel>], iteration_bounds = array<i64: 1>, scalar_prefetch = 1 : i64, scratch_operands = 0 : i64, tpu.core_type = #tpu.core_type<tc>, window_params = [{transform_indices = @transform_0, window_bounds = array<i64: 16, 128>}, {transform_indices = @transform_1, window_bounds = array<i64: 16, 128>}]} {
    %c16_i32 = arith.constant 16 : i32
    %0 = arith.muli %arg0, %c16_i32 : i32
    %1 = tpu.iota {dimensions = array<i32: 0>} : vector<16x128xi32>
    %2 = tpu.iota {dimensions = array<i32: 1>} : vector<16x128xi32>
    %3 = vector.broadcast %0 : i32 to vector<16x128xi32>
    %4 = arith.addi %3, %1 : vector<16x128xi32>
    %c128_i32 = arith.constant 128 : i32
    %5 = vector.broadcast %c128_i32 : i32 to vector<16x128xi32>
    %6 = arith.muli %4, %5 : vector<16x128xi32>
    %7 = arith.addi %6, %2 : vector<16x128xi32>
    %c0 = arith.constant 0 : index
    %8 = memref.load %arg1[%c0] : memref<1xi32, #tpu.memory_space<smem>>
    %c-1640531527_i32 = arith.constant -1640531527 : i32
    %9 = arith.muli %8, %c-1640531527_i32 : i32
    %c843314857_i32 = arith.constant 843314857 : i32
    %10 = arith.addi %9, %c843314857_i32 : i32
    %11 = vector.broadcast %10 : i32 to vector<16x128xi32>
    %12 = arith.xori %7, %11 : vector<16x128xi32>
    %c16_i32_0 = arith.constant 16 : i32
    %13 = vector.broadcast %c16_i32_0 : i32 to vector<16x128xi32>
    %14 = arith.shrsi %12, %13 : vector<16x128xi32>
    %c65535_i32 = arith.constant 65535 : i32
    %15 = vector.broadcast %c65535_i32 : i32 to vector<16x128xi32>
    %16 = arith.andi %14, %15 : vector<16x128xi32>
    %17 = arith.xori %12, %16 : vector<16x128xi32>
    %c-2048144789_i32 = arith.constant -2048144789 : i32
    %18 = vector.broadcast %c-2048144789_i32 : i32 to vector<16x128xi32>
    %19 = arith.muli %17, %18 : vector<16x128xi32>
    %c13_i32 = arith.constant 13 : i32
    %20 = vector.broadcast %c13_i32 : i32 to vector<16x128xi32>
    %21 = arith.shrsi %19, %20 : vector<16x128xi32>
    %c524287_i32 = arith.constant 524287 : i32
    %22 = vector.broadcast %c524287_i32 : i32 to vector<16x128xi32>
    %23 = arith.andi %21, %22 : vector<16x128xi32>
    %24 = arith.xori %19, %23 : vector<16x128xi32>
    %c-1028477387_i32 = arith.constant -1028477387 : i32
    %25 = vector.broadcast %c-1028477387_i32 : i32 to vector<16x128xi32>
    %26 = arith.muli %24, %25 : vector<16x128xi32>
    %c16_i32_1 = arith.constant 16 : i32
    %27 = vector.broadcast %c16_i32_1 : i32 to vector<16x128xi32>
    %28 = arith.shrsi %26, %27 : vector<16x128xi32>
    %c65535_i32_2 = arith.constant 65535 : i32
    %29 = vector.broadcast %c65535_i32_2 : i32 to vector<16x128xi32>
    %30 = arith.andi %28, %29 : vector<16x128xi32>
    %31 = arith.xori %26, %30 : vector<16x128xi32>
    %c0_i32 = arith.constant 0 : i32
    %32 = vector.broadcast %c0_i32 : i32 to vector<16x128xi32>
    %33 = arith.cmpi sge, %31, %32 : vector<16x128xi32>
    %c0_3 = arith.constant 0 : index
    %c0_4 = arith.constant 0 : index
    %34 = vector.load %arg2[%c0_3, %c0_4] : memref<16x128xf32, #tpu.memory_space<vmem>>, vector<16x128xf32>
    %cst = arith.constant 2.000000e+00 : f32
    %35 = vector.broadcast %cst : f32 to vector<16x128xf32>
    %36 = arith.mulf %34, %35 : vector<16x128xf32>
    %c0_i32_5 = arith.constant 0 : i32
    %37 = arith.sitofp %c0_i32_5 : i32 to f32
    %38 = vector.broadcast %37 : f32 to vector<16x128xf32>
    %39 = arith.select %33, %36, %38 : vector<16x128xi1>, vector<16x128xf32>
    %c0_6 = arith.constant 0 : index
    %c0_7 = arith.constant 0 : index
    %40 = vector.load %arg3[%c0_6, %c0_7] : memref<16x128xf32, #tpu.memory_space<vmem>>, vector<16x128xf32>
    tpu.vector_store %arg3[%c0_6, %c0_7], %39 {strides = array<i32>} : memref<16x128xf32, #tpu.memory_space<vmem>>, vector<16x128xf32>,
    return
  }
  func.func @transform_0(%arg0: i32, %arg1: memref<1xi32, #tpu.memory_space<smem>>) -> (i32, i32) {
    %c0_i32 = arith.constant 0 : i32
    %c0_i32_0 = arith.constant 0 : i32
    return %arg0, %c0_i32 : i32, i32
  }
  func.func @transform_1(%arg0: i32, %arg1: memref<1xi32, #tpu.memory_space<smem>>) -> (i32, i32) {
    %c0_i32 = arith.constant 0 : i32
    %c0_i32_0 = arith.constant 0 : i32
    return %arg0, %c0_i32 : i32, i32
  }
}

</mosaic_0001>

<llo_original>
// kernel: tpu_custom_call.1
$region0: #{tpu_custom_call.1}
  #allocation0 [shape = 'u32[]', space=smem, size = 0x4, offset = 0x4, fixed_abs, tag = 'smem constant byte address 0x4 - core index']
  #allocation1 [shape = 'u32[144,128]{1,0:T(1,128)}', space=vmem, size = 0x12000, scoped, tag = 'internal scratch']
  #allocation2 [shape = 's32[1]{0}', space=sflag, size = 0x4, scoped, tag = 'scoped memory for tpu_custom_call.1']
  #allocation3 [shape = 's32[1]{0:T(128)S(6)}', space=smem, size = 0x200, scoped, tag = 'prefetched SMEM operand 0']
  %s0 = inlined_call_operand.<no memory space> [shape: s32[1], index: 0, kind: input, shape index: {}]
  %s1 = inlined_call_operand.hbm [shape: f32[16,128], index: 1, kind: input, shape index: {}]
  %s2 = inlined_call_operand.hbm [shape: f32[16,128], index: 2, kind: output, shape index: {}]
  %s3 = sld [smem:[#allocation0]]
  $region18: #{tpu_custom_call.1} parent=0
    _
  %s5 = ssub.s32 1, %s3
  %s6 = scalar_select 0, %s5, %s3
  %7 = sst [smem:[#allocation3]] %s0
  $region1: #{tpu_custom_call.1} parent=0
    #allocation4 [shape = 'u8[8192]{0}', space=vmem, size = 0x2000, scoped, tag = 'input window, operand 1, single buffered']
    #allocation5 [shape = 's32[1]{0}', space=sflag, size = 0x4, scoped, tag = 'scoped memory for tpu_custom_call.1']
    #allocation6 [shape = 's32[1]{0}', space=sflag, size = 0x4, scoped, tag = 'scoped memory for tpu_custom_call.1']
    #allocation7 [shape = 'u8[8192]{0}', space=vmem, size = 0x2000, scoped, tag = 'output window, operand 0, single buffered']
    %8 = vsyncpa [#allocation5], 0
    %9 = vsyncpa [#allocation6], 0
    // Predicated region
    $region2: #{tpu_custom_call.1} parent=1 // pred_check
      _
    $region3: #{tpu_custom_call.1} parent=1 // pred_check_branch
      %11 = sbr.rel (0) target = $region5
    $region4: #{tpu_custom_call.1} parent=1 // pred_region
      %s13 = ssub.s32 256, 256
      %14 = vsyncadd [#allocation5], %s13
      %s15 = sshll.u32 [#allocation4], 4
      %s16 = int_to_ptr.vmem [resolvable:$true] %s15
      %21 = dma.hbm_to_vmem [thread:$0]  %s1, 256, %s16, [#allocation5], 128, 128, 8
    $region5: #{tpu_custom_call.1} parent=1 // pred_fallthru
      _
    // Predicated region
    $region6: #{tpu_custom_call.1} parent=1 // pred_check
      _
    $region7: #{tpu_custom_call.1} parent=1 // pred_check_branch
      %23 = sbr.rel (0) target = $region9
    $region8: #{tpu_custom_call.1} parent=1 // pred_region
      %24 = dma.done [#allocation5], 256
    $region9: #{tpu_custom_call.1} parent=1 // pred_fallthru
      _
    %s25 = smul.u32 0, 16
    %v26 = vlaneseq
    %v27 = vshrl.u32 %v26, 7
    %v28 = vadd.s32 %v27, 8
    %v29 = vlaneseq
    %v30 = vand.u32 %v29, 127
    %v31 = vstv %s25
    %v32 = vadd.s32 %v31, %v27
    %v33 = vadd.s32 %v31, %v28
    %v34 = vmul.u32 %v32, 128
    %v35 = vmul.u32 %v33, 128
    %v36 = vadd.s32 %v34, %v30
    %v37 = vadd.s32 %v35, %v30
    %s38 = sld [smem:[#allocation3]]
    %s39 = smul.u32 %s38, 2654435769
    %s40 = sadd.s32 %s39, 843314857
    %v41 = vstv %s40
    %v42 = vxor.u32 %v36, %v41
    %v43 = vxor.u32 %v37, %v41
    %v44 = vshra.s32 %v42, 16
    %v45 = vshra.s32 %v43, 16
    %v46 = vand.u32 %v44, 65535
    %v47 = vand.u32 %v45, 65535
    %v48 = vxor.u32 %v42, %v46
    %v49 = vxor.u32 %v43, %v47
    %v50 = vmul.u32 %v48, 2246822507
    %v51 = vmul.u32 %v49, 2246822507
    %v52 = vshra.s32 %v50, 13
    %v53 = vshra.s32 %v51, 13
    %v54 = vand.u32 %v52, 524287
    %v55 = vand.u32 %v53, 524287
    %v56 = vxor.u32 %v50, %v54
    %v57 = vxor.u32 %v51, %v55
    %v58 = vmul.u32 %v56, 3266489909
    %v59 = vmul.u32 %v57, 3266489909
    %v60 = vshra.s32 %v58, 16
    %v61 = vshra.s32 %v59, 16
    %v62 = vand.u32 %v60, 65535
    %v63 = vand.u32 %v61, 65535
    %v64 = vxor.u32 %v58, %v62
    %v65 = vxor.u32 %v59, %v63
    %vm66 = vcmp.ge.s32.totalorder %v64, 0
    %vm67 = vcmp.ge.s32.totalorder %v65, 0
    %v68 = vld [vmem:[#allocation4] sm:$0xff]
    %v69 = vld [vmem:[#allocation4 + $0x8] sm:$0xff]
    %v70 = vmul.f32 %v68, 2.0
    %v71 = vmul.f32 %v69, 2.0
    %v72 = vsel %vm66, %v70, 0.0
    %v73 = vsel %vm67, %v71, 0.0
    %74 = vst [vmem:[#allocation7] sm:$0xff] %v72
    %75 = vst [vmem:[#allocation7 + $0x8] sm:$0xff] %v73
    // Predicated region
    $region10: #{tpu_custom_call.1} parent=1 // pred_check
      _
    $region11: #{tpu_custom_call.1} parent=1 // pred_check_branch
      %77 = sbr.rel (0) target = $region13
    $region12: #{tpu_custom_call.1} parent=1 // pred_region
      %s79 = ssub.s32 256, 256
      %80 = vsyncadd [#allocation6], %s79
      %s81 = sshll.u32 [#allocation7], 4
      %s82 = int_to_ptr.vmem [resolvable:$true] %s81
      %87 = dma.vmem_to_hbm [thread:$0]  %s82, 256, %s2, [#allocation6], 128, 128, 8
    $region13: #{tpu_custom_call.1} parent=1 // pred_fallthru
      _
    // Predicated region
    $region14: #{tpu_custom_call.1} parent=1 // pred_check
      _
    $region15: #{tpu_custom_call.1} parent=1 // pred_check_branch
      %89 = sbr.rel (0) target = $region17
    $region16: #{tpu_custom_call.1} parent=1 // pred_region
      %90 = dma.done [#allocation6], 256
    $region17: #{tpu_custom_call.1} parent=1 // pred_fallthru
      _
    %91 = vsyncpa [#allocation5], 1
    %92 = vsyncpa [#allocation6], 1

</llo_original>
